<compile_context>
chip_gen: v7x
topology: tpu7x:2x2x1
jax: 0.10.0
libtpu: 0.0.40
codegen_flags: <defaults>
</compile_context>

<pallas_src>
import math
import functools

import jax
import jax.numpy as jnp
from jax import lax
from jax.experimental import pallas as pl
from jax.experimental.pallas import tpu as pltpu


# ---------------------------------------------------------------------------
# Hardware queries (cached)
# ---------------------------------------------------------------------------
@functools.lru_cache(maxsize=1)
def _chip_generation():
    try:
        kind = jax.devices()[0].device_kind.lower()
    except Exception:
        return 6
    for gen in (7, 6, 5, 4):
        if f"v{gen}" in kind:
            return gen
    return 6


@functools.lru_cache(maxsize=1)
def _physical_vmem_bytes():
    try:
        return int(pltpu.get_tpu_info().vmem_capacity_bytes)
    except Exception:
        # v7x: 64 MiB per TC; v5e/v6e: 128 MiB.
        return (64 << 20) if _chip_generation() >= 7 else (128 << 20)


@functools.lru_cache(maxsize=1)
def _buffered_single_supported():
    """One-time cached probe: does this build accept pipeline_mode=pl.Buffered(1)?"""
    def _probe(x_ref, o_ref):
        o_ref[...] = x_ref[...]
    try:
        spec = pl.BlockSpec((8, 128), lambda i: (0, 0), pipeline_mode=pl.Buffered(1))
        fn = pl.pallas_call(
            _probe,
            out_shape=jax.ShapeDtypeStruct((8, 128), jnp.float32),
            grid=(1,),
            in_specs=[spec],
            out_specs=pl.BlockSpec((8, 128), lambda i: (0, 0)),
        )
        jax.block_until_ready(fn(jnp.zeros((8, 128), jnp.float32)))
        return True
    except Exception:  # narrow scope: only this trivial probe is guarded
        return False


# ---------------------------------------------------------------------------
# Path A: one-hot MXU gather (small vocab).
# ---------------------------------------------------------------------------
def _embed_onehot_kernel(ids_ref, emb_ref, out_ref, *, scale, onehot_dtype):
    # ids_ref : VMEM (TB, 1) int32  -- this block's token ids (one per sublane)
    # emb_ref : VMEM (Vp, H)        -- full (vocab-padded) table, VMEM-resident
    # out_ref : VMEM (TB, H)
    tb = out_ref.shape[0]
    vocab = emb_ref.shape[0]
    col = lax.broadcasted_iota(jnp.int32, (tb, vocab), 1)
    # One-hot in the table's native dtype (0/1 exact in bf16): no per-step
    # whole-table upcast, single-pass bf16 MXU matmul when the table is bf16.
    onehot = (ids_ref[...] == col).astype(onehot_dtype)
    rows = jnp.dot(onehot, emb_ref[...], preferred_element_type=jnp.float32)
    out_ref[...] = (rows * scale).astype(out_ref.dtype)


# ---------------------------------------------------------------------------
# Path B: SMEM-ids row gather (larger vocab that still fits in VMEM).
# ---------------------------------------------------------------------------
def _embed_gather_kernel(ids_ref, emb_ref, out_ref, *, tokens_per_block, scale):
    # ids_ref : SMEM (1, TB) int32  -- this block's token ids
    # emb_ref : VMEM (V, H)         -- full table, VMEM-resident
    # out_ref : VMEM (TB, H)
    def body(t, carry):
        tok = ids_ref[0, t]
        # Scale + cast folded into the row copy: rides otherwise-idle VALU
        # slots instead of an extra dense (TB,H) pass on the saturated vst slot.
        row = emb_ref[pl.ds(tok, 1), :].astype(jnp.float32) * scale
        out_ref[pl.ds(t, 1), :] = row.astype(out_ref.dtype)
        return carry

    lax.fori_loop(0, tokens_per_block, body, 0, unroll=8)


# ---------------------------------------------------------------------------
# Builders / wrapper
# ---------------------------------------------------------------------------
def _table_spec(v, h, index_map, single_buffer):
    if single_buffer:
        # Constant index_map: double-buffering would only double VMEM use.
        return pl.BlockSpec((v, h), index_map, pipeline_mode=pl.Buffered(1))
    return pl.BlockSpec((v, h), index_map)


def _compiler_params(vmem_estimate_bytes):
    physical = _physical_vmem_bytes()
    # Generation-aware cap (~90% of physical VMEM) instead of a hard 64 MiB.
    vmem_limit = int(min(max(vmem_estimate_bytes, 16 << 20), int(0.9 * physical)))
    return pltpu.CompilerParams(
        # Independent token blocks.  On v7x this lets the grid be sharded across
        # the two TensorCores (each holding its own resident table copy).
        # TODO(synk): verify in xprof that the 1-D grid is core-sharded on v7x;
        # if not, switch to pltpu.CORE_PARALLEL with an explicit core axis.
        dimension_semantics=("parallel",),
        vmem_limit_bytes=vmem_limit,
    )


def embedding_forward(x, emb_table, *, tokens_per_block=None, use_one_hot=None,
                      out_dtype=None, table_compute_dtype=None):
    """x: (batch, seq) integer ids; emb_table: (vocab, num_hiddens) float.

    Returns (batch, seq, num_hiddens) = emb_table[x] * sqrt(num_hiddens).

    out_dtype: output dtype (default: table dtype).  bf16 halves the dominant
      N*H HBM write when downstream activations are bf16.
    table_compute_dtype: opt-in compute dtype for Path A's matmul operand
      (e.g. jnp.bfloat16 for an f32-stored table).  Changes numerics slightly.
    """
    batch, seq = x.shape
    vocab, num_hiddens = emb_table.shape
    n_tokens = batch * seq
    gen = _chip_generation()

    out_dtype = jnp.dtype(out_dtype) if out_dtype is not None else emb_table.dtype

    # Opt-in bf16 (or other) table copy for Path A's MXU operand.
    if (table_compute_dtype is not None
            and jnp.dtype(table_compute_dtype) != emb_table.dtype):
        table_a = emb_table.astype(table_compute_dtype)
    else:
        table_a = emb_table

    # Token tile: big blocks amortize the ~0.35us/grid-step overhead and keep
    # output stores lane-dense.  512 on v5e/v6e (128 MiB VMEM), 256 on v7x
    # (64 MiB must also hold the (TB, Vp) one-hot temporaries).
    if tokens_per_block is None:
        tokens_per_block = 512 if gen <= 6 else 256
    tb = max(8, (int(tokens_per_block) // 8) * 8)
    tb = min(tb, ((n_tokens + 7) // 8) * 8)
    n_padded = ((n_tokens + tb - 1) // tb) * tb
    n_blocks = n_padded // tb

    # Clamp ids (avoids silent OOB VMEM reads; note PyTorch would raise on OOB
    # ids) and pad the tail block with token 0; padded rows are sliced off.
    ids = jnp.clip(x.reshape(n_tokens).astype(jnp.int32), 0, vocab - 1)
    ids = jnp.pad(ids, (0, n_padded - n_tokens))

    scale = float(math.sqrt(num_hiddens))
    single_buffer = _buffered_single_supported()
    physical_vmem = _physical_vmem_bytes()

    if use_one_hot is None:
        # Path B is vst-slot-bound; the MXU one-hot crossover is much lower on
        # v5e (197 TF/s MXU, no bf16 VPU) than on v6e/v7x.
        onehot_vocab_limit = 1024 if gen <= 5 else 8192
        use_one_hot = vocab <= onehot_vocab_limit

    # Per-TC residency budget: the resident table must fit next to the out
    # double-buffer, one-hot temporaries and internal scratch.
    table_bytes = vocab * num_hiddens * emb_table.dtype.itemsize
    table_budget = int(0.75 * physical_vmem)
    if table_bytes * (1 if single_buffer else 2) > table_budget:
        # TODO(synk): HBM-resident DMA-gather path (memory_space=pl.ANY table,
        # double-buffered pltpu.make_async_copy row gathers) for huge vocabs.
        raise ValueError(
            f"embedding table ({table_bytes / 2**20:.1f} MiB) exceeds the VMEM "
            f"residency budget ({table_budget / 2**20:.1f} MiB); the HBM "
            f"DMA-gather path is not implemented yet.")

    out_block_bytes = tb * num_hiddens * jnp.dtype(out_dtype).itemsize

    if use_one_hot:
        # Pad the MXU contraction dim (vocab) to a multiple of 128; ids never
        # index the zero-padding rows, so results are unchanged.
        v_pad = max(128, ((vocab + 127) // 128) * 128)
        if v_pad != vocab:
            table_a = jnp.pad(table_a, ((0, v_pad - vocab), (0, 0)))
        onehot_dtype = table_a.dtype  # bf16 one-hot iff table is bf16 (0/1 exact)
        table_a_bytes = v_pad * num_hiddens * table_a.dtype.itemsize
        est = (table_a_bytes * (1 if single_buffer else 2)
               + 2 * out_block_bytes
               + tb * v_pad * jnp.dtype(onehot_dtype).itemsize
               + 4 * tb * 4 + (4 << 20))
        kernel = functools.partial(_embed_onehot_kernel, scale=scale,
                                   onehot_dtype=onehot_dtype)
        call = pl.pallas_call(
            kernel,
            out_shape=jax.ShapeDtypeStruct((n_padded, num_hiddens), out_dtype),
            grid_spec=pltpu.PrefetchScalarGridSpec(
                num_scalar_prefetch=0,
                grid=(n_blocks,),
                in_specs=[
                    pl.BlockSpec((tb, 1), lambda i: (i, 0)),
                    _table_spec(v_pad, num_hiddens, lambda i: (0, 0),
                                single_buffer),
                ],
                out_specs=pl.BlockSpec((tb, num_hiddens), lambda i: (i, 0)),
            ),
            compiler_params=_compiler_params(est),
        )
        out_flat = call(ids.reshape(n_padded, 1), table_a)
    else:
        est = (table_bytes * (1 if single_buffer else 2)
               + 2 * out_block_bytes + (4 << 20))
        kernel = functools.partial(_embed_gather_kernel,
                                   tokens_per_block=tb, scale=scale)
        call = pl.pallas_call(
            kernel,
            out_shape=jax.ShapeDtypeStruct((n_padded, num_hiddens), out_dtype),
            grid_spec=pltpu.PrefetchScalarGridSpec(
                num_scalar_prefetch=0,
                grid=(n_blocks,),
                in_specs=[
                    # Blocked SMEM ids: bounds per-call SMEM to TB ints
                    # regardless of total token count N.
                    pl.BlockSpec((1, tb), lambda i: (i, 0),
                                 memory_space=pltpu.MemorySpace.SMEM),
                    _table_spec(vocab, num_hiddens, lambda i: (0, 0),
                                single_buffer),
                ],
                out_specs=pl.BlockSpec((tb, num_hiddens), lambda i: (i, 0)),
            ),
            compiler_params=_compiler_params(est),
        )
        out_flat = call(ids.reshape(n_blocks, tb), emb_table)

    out_flat = out_flat[:n_tokens]
    return out_flat.reshape(batch, seq, num_hiddens)


if __name__ == "__main__":
    # Module config (small, consistent with Embedding(num_hiddens, vocab_size))
    num_hiddens = 128
    vocab_size = 64
    batch, seq = 2, 8

    key = jax.random.PRNGKey(0)
    k_emb, k_ids = jax.random.split(key)

    # Deterministic parameter init (nn.Embedding default: N(0, 1))
    emb_table = jax.random.normal(k_emb, (vocab_size, num_hiddens), dtype=jnp.float32)
    x = jax.random.randint(k_ids, (batch, seq), 0, vocab_size, dtype=jnp.int32)

    ref = emb_table[x] * math.sqrt(num_hiddens)

    # Path A: one-hot MXU gather (default for small vocab).
    out_a = jax.block_until_ready(embedding_forward(x, emb_table))
    assert out_a.shape == (batch, seq, num_hiddens)
    assert jnp.allclose(out_a, ref, atol=1e-4, rtol=1e-4)

    # Path B: SMEM-ids row gather (forced, for coverage).
    out_b = jax.block_until_ready(embedding_forward(x, emb_table, use_one_hot=False))
    assert jnp.allclose(out_b, ref, atol=1e-5, rtol=1e-5)

    # bf16 output variant (halves the dominant N*H HBM write downstream).
    out_c = jax.block_until_ready(
        embedding_forward(x, emb_table, out_dtype=jnp.bfloat16))
    assert out_c.dtype == jnp.bfloat16
    assert jnp.allclose(out_c.astype(jnp.float32), ref, atol=5e-2, rtol=2e-2)

    print("KERNEL_OK")
</pallas_src>

<mosaic_0001>
module attributes {stable_mosaic.version = 11 : i64} {
  func.func @_probe(%arg0: i32, %arg1: memref<8x128xf32, #tpu.memory_space<vmem>>, %arg2: memref<8x128xf32, #tpu.memory_space<vmem>>) attributes {dimension_semantics = [#tpu.dimension_semantics<arbitrary>], iteration_bounds = array<i64: 1>, scalar_prefetch = 0 : i64, scratch_operands = 0 : i64, tpu.core_type = #tpu.core_type<tc>, window_params = [{pipeline_mode = #tpu.pipeline_mode<synchronous>, transform_indices = @transform_0, window_bounds = array<i64: 8, 128>}, {pipeline_mode = #tpu.pipeline_mode<synchronous>, transform_indices = @transform_1, window_bounds = array<i64: 8, 128>}]} {
    %c0 = arith.constant 0 : index
    %c0_0 = arith.constant 0 : index
    %0 = vector.load %arg1[%c0, %c0_0] : memref<8x128xf32, #tpu.memory_space<vmem>>, vector<8x128xf32>
    %c0_1 = arith.constant 0 : index
    %c0_2 = arith.constant 0 : index
    %1 = vector.load %arg2[%c0_1, %c0_2] : memref<8x128xf32, #tpu.memory_space<vmem>>, vector<8x128xf32>
    tpu.vector_store %arg2[%c0_1, %c0_2], %0 {strides = array<i32>} : memref<8x128xf32, #tpu.memory_space<vmem>>, vector<8x128xf32>,
    return
  }
  func.func @transform_0(%arg0: i32) -> (i32, i32) {
    %c0_i32 = arith.constant 0 : i32
    %c0_i32_0 = arith.constant 0 : i32
    %c0_i32_1 = arith.constant 0 : i32
    return %c0_i32, %c0_i32_0 : i32, i32
  }
  func.func @transform_1(%arg0: i32) -> (i32, i32) {
    %c0_i32 = arith.constant 0 : i32
    %c0_i32_0 = arith.constant 0 : i32
    %c0_i32_1 = arith.constant 0 : i32
    return %c0_i32, %c0_i32_0 : i32, i32
  }
}

module attributes {stable_mosaic.version = 11 : i64} {
  func.func @_embed_onehot_kernel(%arg0: i32, %arg1: memref<16x1xi32, #tpu.memory_space<vmem>>, %arg2: memref<128x128xf32, #tpu.memory_space<vmem>>, %arg3: memref<16x128xf32, #tpu.memory_space<vmem>>) attributes {dimension_semantics = [#tpu.dimension_semantics<parallel>], iteration_bounds = array<i64: 1>, scalar_prefetch = 0 : i64, scratch_operands = 0 : i64, tpu.core_type = #tpu.core_type<tc>, window_params = [{transform_indices = @transform_0, window_bounds = array<i64: 16, 1>}, {pipeline_mode = #tpu.pipeline_mode<synchronous>, transform_indices = @transform_1, window_bounds = array<i64: 128, 128>}, {transform_indices = @transform_2, window_bounds = array<i64: 16, 128>}]} {
    %0 = tpu.iota {dimensions = array<i32: 1>} : vector<16x128xi32>
    %c0 = arith.constant 0 : index
    %c0_0 = arith.constant 0 : index
    %1 = vector.load %arg1[%c0, %c0_0] : memref<16x1xi32, #tpu.memory_space<vmem>>, vector<16x1xi32>
    %2 = vector.broadcast %1 : vector<16x1xi32> to vector<16x128xi32>
    %3 = arith.cmpi eq, %2, %0 : vector<16x128xi32>
    %4 = arith.extui %3 : vector<16x128xi1> to vector<16x128xi32>
    %5 = arith.sitofp %4 : vector<16x128xi32> to vector<16x128xf32>
    %c0_1 = arith.constant 0 : index
    %c0_2 = arith.constant 0 : index
    %6 = vector.load %arg2[%c0_1, %c0_2] : memref<128x128xf32, #tpu.memory_space<vmem>>, vector<128x128xf32>
    %cst = arith.constant dense<0.000000e+00> : vector<16x128xf32>
    %7 = tpu.matmul %5, %6, %cst {dimension_numbers = #tpu.dot_dimension_numbers<[1], [0], [0], [1], [0, 0, 1, 1], [], []>} : vector<16x128xf32>, vector<128x128xf32>, vector<16x128xf32> -> vector<16x128xf32>
    %cst_3 = arith.constant 11.3137083 : f32
    %8 = vector.broadcast %cst_3 : f32 to vector<16x128xf32>
    %9 = arith.mulf %7, %8 : vector<16x128xf32>
    %c0_4 = arith.constant 0 : index
    %c0_5 = arith.constant 0 : index
    %10 = vector.load %arg3[%c0_4, %c0_5] : memref<16x128xf32, #tpu.memory_space<vmem>>, vector<16x128xf32>
    tpu.vector_store %arg3[%c0_4, %c0_5], %9 {strides = array<i32>} : memref<16x128xf32, #tpu.memory_space<vmem>>, vector<16x128xf32>,
    return
  }
  func.func @transform_0(%arg0: i32) -> (i32, i32) {
    %c0_i32 = arith.constant 0 : i32
    %c0_i32_0 = arith.constant 0 : i32
    return %arg0, %c0_i32 : i32, i32
  }
  func.func @transform_1(%arg0: i32) -> (i32, i32) {
    %c0_i32 = arith.constant 0 : i32
    %c0_i32_0 = arith.constant 0 : i32
    %c0_i32_1 = arith.constant 0 : i32
    return %c0_i32, %c0_i32_0 : i32, i32
  }
  func.func @transform_2(%arg0: i32) -> (i32, i32) {
    %c0_i32 = arith.constant 0 : i32
    %c0_i32_0 = arith.constant 0 : i32
    return %arg0, %c0_i32 : i32, i32
  }
}

</mosaic_0001>

<llo_original>
// kernel: tpu_custom_call.1
$region0: #{tpu_custom_call.1}
  #allocation0 [shape = 'u32[]', space=smem, size = 0x4, offset = 0x4, fixed_abs, tag = 'smem constant byte address 0x4 - core index']
  #allocation1 [shape = 'u32[144,128]{1,0:T(1,128)}', space=vmem, size = 0x12000, scoped, tag = 'internal scratch']
  %s0 = inlined_call_operand.hbm [shape: f32[8,128], index: 0, kind: input, shape index: {}]
  %s1 = inlined_call_operand.hbm [shape: f32[8,128], index: 1, kind: output, shape index: {}]
  %s2 = sld [smem:[#allocation0]]
  $region18: #{tpu_custom_call.1} parent=0
    _
  %s4 = ssub.s32 1, %s2
  %s5 = scalar_select 0, %s4, %s2
  $region1: #{tpu_custom_call.1} parent=0
    #allocation2 [shape = 'u8[4096]{0}', space=vmem, size = 0x1000, scoped, tag = 'input window, operand 0, single buffered']
    #allocation3 [shape = 's32[1]{0}', space=sflag, size = 0x4, scoped, tag = 'scoped memory for tpu_custom_call.1']
    #allocation4 [shape = 's32[1]{0}', space=sflag, size = 0x4, scoped, tag = 'scoped memory for tpu_custom_call.1']
    #allocation5 [shape = 'u8[4096]{0}', space=vmem, size = 0x1000, scoped, tag = 'output window, operand 0, single buffered']
    %6 = vsyncpa [#allocation3], 0
    %7 = vsyncpa [#allocation4], 0
    // Predicated region
    $region2: #{tpu_custom_call.1} parent=1 // pred_check
      _
    $region3: #{tpu_custom_call.1} parent=1 // pred_check_branch
      %9 = sbr.rel (0) target = $region5
    $region4: #{tpu_custom_call.1} parent=1 // pred_region
      %s11 = ssub.s32 128, 128
      %12 = vsyncadd [#allocation3], %s11
      %s14 = sshll.u32 [#allocation2], 4
      %s15 = int_to_ptr.vmem [resolvable:$true] %s14
      %17 = dma.hbm_to_vmem [thread:$0]  %s0, 128, %s15, [#allocation3]
    $region5: #{tpu_custom_call.1} parent=1 // pred_fallthru
      _
    // Predicated region
    $region6: #{tpu_custom_call.1} parent=1 // pred_check
      _
    $region7: #{tpu_custom_call.1} parent=1 // pred_check_branch
      %19 = sbr.rel (0) target = $region9
    $region8: #{tpu_custom_call.1} parent=1 // pred_region
      %20 = dma.done [#allocation3], 128
    $region9: #{tpu_custom_call.1} parent=1 // pred_fallthru
      _
    %v21 = vld [vmem:[#allocation2] sm:$0xff]
    %22 = vst [vmem:[#allocation5] sm:$0xff] %v21
    // Predicated region
    $region10: #{tpu_custom_call.1} parent=1 // pred_check
      _
    $region11: #{tpu_custom_call.1} parent=1 // pred_check_branch
      %24 = sbr.rel (0) target = $region13
    $region12: #{tpu_custom_call.1} parent=1 // pred_region
      %s26 = ssub.s32 128, 128
      %27 = vsyncadd [#allocation4], %s26
      %s29 = sshll.u32 [#allocation5], 4
      %s30 = int_to_ptr.vmem [resolvable:$true] %s29
      %32 = dma.vmem_to_hbm [thread:$0]  %s30, 128, %s1, [#allocation4]
    $region13: #{tpu_custom_call.1} parent=1 // pred_fallthru
      _
    // Predicated region
    $region14: #{tpu_custom_call.1} parent=1 // pred_check
      _
    $region15: #{tpu_custom_call.1} parent=1 // pred_check_branch
      %34 = sbr.rel (0) target = $region17
    $region16: #{tpu_custom_call.1} parent=1 // pred_region
      %35 = dma.done [#allocation4], 128
    $region17: #{tpu_custom_call.1} parent=1 // pred_fallthru
      _
    %36 = vsyncpa [#allocation3], 1
    %37 = vsyncpa [#allocation4], 1

// kernel: tpu_custom_call.1
$region0: #{tpu_custom_call.1}
  #allocation0 [shape = 'u32[]', space=smem, size = 0x4, offset = 0x4, fixed_abs, tag = 'smem constant byte address 0x4 - core index']
  #allocation1 [shape = 'u32[144,128]{1,0:T(1,128)}', space=vmem, size = 0x12000, scoped, tag = 'internal scratch']
  %s0 = inlined_call_operand.vmem [shape: s32[16,1], index: 0, kind: input, shape index: {}]
  %s1 = inlined_call_operand.hbm [shape: f32[128,128], index: 1, kind: input, shape index: {}]
  %s2 = inlined_call_operand.hbm [shape: f32[16,128], index: 2, kind: output, shape index: {}]
  %s3 = sld [smem:[#allocation0]]
  $region22: #{tpu_custom_call.1} parent=0
    _
  %s5 = ssub.s32 1, %s3
  %s6 = scalar_select 0, %s5, %s3
  $region1: #{tpu_custom_call.1} parent=0
    #allocation2 [shape = 'u8[65536]{0}', space=vmem, size = 0x10000, scoped, tag = 'input window, operand 1, single buffered']
    #allocation3 [shape = 's32[1]{0}', space=sflag, size = 0x4, scoped, tag = 'scoped memory for tpu_custom_call.1']
    #allocation4 [shape = 's32[1]{0}', space=sflag, size = 0x4, scoped, tag = 'scoped memory for tpu_custom_call.1']
    #allocation5 [shape = 'u8[8192]{0}', space=vmem, size = 0x2000, scoped, tag = 'output window, operand 0, single buffered']
    %7 = vsyncpa [#allocation3], 0
    %8 = vsyncpa [#allocation4], 0
    // Predicated region
    $region2: #{tpu_custom_call.1} parent=1 // pred_check
      _
    $region3: #{tpu_custom_call.1} parent=1 // pred_check_branch
      %10 = sbr.rel (0) target = $region5
    $region4: #{tpu_custom_call.1} parent=1 // pred_region
      _
    $region5: #{tpu_custom_call.1} parent=1 // pred_fallthru
      _
    // Predicated region
    $region6: #{tpu_custom_call.1} parent=1 // pred_check
      _
    $region7: #{tpu_custom_call.1} parent=1 // pred_check_branch
      %12 = sbr.rel (0) target = $region9
    $region8: #{tpu_custom_call.1} parent=1 // pred_region
      %s14 = ssub.s32 2048, 2048
      %15 = vsyncadd [#allocation3], %s14
      %s16 = sshll.u32 [#allocation2], 4
      %s17 = int_to_ptr.vmem [resolvable:$true] %s16
      %22 = dma.hbm_to_vmem [thread:$0]  %s1, 2048, %s17, [#allocation3], 128, 128, 8
    $region9: #{tpu_custom_call.1} parent=1 // pred_fallthru
      _
    // Predicated region
    $region10: #{tpu_custom_call.1} parent=1 // pred_check
      _
    $region11: #{tpu_custom_call.1} parent=1 // pred_check_branch
      %24 = sbr.rel (0) target = $region13
    $region12: #{tpu_custom_call.1} parent=1 // pred_region
      %25 = dma.done [#allocation3], 2048
    $region13: #{tpu_custom_call.1} parent=1 // pred_fallthru
      _
    %v26 = vlaneseq
    %v27 = vand.u32 %v26, 127
    %v28 = vld [vmem:[%s0] sm:$0xff]
    %v29 = vld [vmem:[%s0 + $0x8] sm:$0xff]
    %30 = vset.pattern.permute.xlu0 0
    %31 = vperm.xlu0 %30, %v28
    %v32 = vpop.permute.xlu0 %31
    %33 = vset.pattern.permute.xlu0 0
    %34 = vperm.xlu0 %33, %v29
    %v35 = vpop.permute.xlu0 %34
    %vm36 = vcmp.eq.s32.totalorder %v32, %v27
    %vm37 = vcmp.eq.s32.totalorder %v35, %v27
    %v38 = vsel %vm36, 1, 0
    %v39 = vsel %vm37, 1, 0
    %v40 = vcvt.s32.f32 %v38
    %v41 = vcvt.s32.f32 %v39
    %v42 = vld [vmem:[#allocation2] sm:$0xff]
    %v43 = vld [vmem:[#allocation2 + $0x8] sm:$0xff]
    %v44 = vld [vmem:[#allocation2 + $0x10] sm:$0xff]
    %v45 = vld [vmem:[#allocation2 + $0x18] sm:$0xff]
    %v46 = vld [vmem:[#allocation2 + $0x20] sm:$0xff]
    %v47 = vld [vmem:[#allocation2 + $0x28] sm:$0xff]
    %v48 = vld [vmem:[#allocation2 + $0x30] sm:$0xff]
    %v49 = vld [vmem:[#allocation2 + $0x38] sm:$0xff]
    %v50 = vld [vmem:[#allocation2 + $0x40] sm:$0xff]
    %v51 = vld [vmem:[#allocation2 + $0x48] sm:$0xff]
    %v52 = vld [vmem:[#allocation2 + $0x50] sm:$0xff]
    %v53 = vld [vmem:[#allocation2 + $0x58] sm:$0xff]
    %v54 = vld [vmem:[#allocation2 + $0x60] sm:$0xff]
    %v55 = vld [vmem:[#allocation2 + $0x68] sm:$0xff]
    %v56 = vld [vmem:[#allocation2 + $0x70] sm:$0xff]
    %v57 = vld [vmem:[#allocation2 + $0x78] sm:$0xff]
    %58 = vmatprep.subr.mxu0 0.0
    %59 = vmatpush1.msra.mxu0 %v42
    %60 = vmatprep.subr.mxu0 0.0
    %61 = vmatpush1.msra.mxu0 %v43
    %62 = vmatprep.subr.mxu0 0.0
    %63 = vmatpush1.msra.mxu0 %v44
    %64 = vmatprep.subr.mxu0 0.0
    %65 = vmatpush1.msra.mxu0 %v45
    %66 = vmatprep.subr.mxu0 0.0
    %67 = vmatpush1.msra.mxu0 %v46
    %68 = vmatprep.subr.mxu0 0.0
    %69 = vmatpush1.msra.mxu0 %v47
    %70 = vmatprep.subr.mxu0 0.0
    %71 = vmatpush1.msra.mxu0 %v48
    %72 = vmatprep.subr.mxu0 0.0
    %73 = vmatpush1.msra.mxu0 %v49
    %74 = vmatprep.subr.mxu0 0.0
    %75 = vmatpush1.msra.mxu0 %v50
    %76 = vmatprep.subr.mxu0 0.0
    %77 = vmatpush1.msra.mxu0 %v51
    %78 = vmatprep.subr.mxu0 0.0
    %79 = vmatpush1.msra.mxu0 %v52
    %80 = vmatprep.subr.mxu0 0.0
    %81 = vmatpush1.msra.mxu0 %v53
    %82 = vmatprep.subr.mxu0 0.0
    %83 = vmatpush1.msra.mxu0 %v54
    %84 = vmatprep.subr.mxu0 0.0
    %85 = vmatpush1.msra.mxu0 %v55
    %86 = vmatprep.subr.mxu0 0.0
    %87 = vmatpush1.msra.mxu0 %v56
    %88 = vmatprep.subr.mxu0 0.0
    %89 = vmatpush1.msra.mxu0 %v57
    %90 = vmatprep.subr.mxu0 0.0
    %91 = vmatpush1.msra.mxu0 0.0
    %92 = vmatprep.subr.mxu0 0.0
    %93 = vmatpush1.msra.mxu0 0.0
    %94 = vmatprep.subr.mxu0 0.0
    %95 = vmatpush1.msra.mxu0 0.0
    %96 = vmatprep.subr.mxu0 0.0
    %97 = vmatpush1.msra.mxu0 0.0
    %98 = vmatprep.subr.mxu0 0.0
    %99 = vmatpush1.msra.mxu0 0.0
    %100 = vmatprep.subr.mxu0 0.0
    %101 = vmatpush1.msra.mxu0 0.0
    %102 = vmatprep.subr.mxu0 0.0
    %103 = vmatpush1.msra.mxu0 0.0
    %104 = vmatprep.subr.mxu0 0.0
    %105 = vmatpush1.msra.mxu0 0.0
    %106 = vmatprep.subr.mxu0 0.0
    %107 = vmatpush1.msra.mxu0 0.0
    %108 = vmatprep.subr.mxu0 0.0
    %109 = vmatpush1.msra.mxu0 0.0
    %110 = vmatprep.subr.mxu0 0.0
    %111 = vmatpush1.msra.mxu0 0.0
    %112 = vmatprep.subr.mxu0 0.0
    %113 = vmatpush1.msra.mxu0 0.0
    %114 = vmatprep.subr.mxu0 0.0
    %115 = vmatpush1.msra.mxu0 0.0
    %116 = vmatprep.subr.mxu0 0.0
    %117 = vmatpush1.msra.mxu0 0.0
    %118 = vmatprep.subr.mxu0 0.0
    %119 = vmatpush1.msra.mxu0 0.0
    %120 = vmatprep.subr.mxu0 0.0
    %121 = vmatpush1.msra.mxu0 0.0
    %122 = vmatprep.mubr.f32.mxu0 0.0
    %123 = vmatmul.mubr.f32.gmra.mrb[0].mxu0 %v40
    %v124 = vpop.f32.mrb[0].mxu0
    %v125 = vadd.f32 0.0, %v124
    %v126 = vpop.f32.mrb[0].mxu0
    %127 = vmatprep.mubr.f32.mxu0 0.0
    %128 = vmatmul.mubr.f32.gmra.mrb[0].mxu0 %v41
    %v129 = vpop.f32.mrb[0].mxu0
    %v130 = vadd.f32 0.0, %v129
    %v131 = vpop.f32.mrb[0].mxu0
    %132 = vdwg.mxu0
    %v133 = vmul.f32 %v125, 11.313708
    %v134 = vmul.f32 %v130, 11.313708
    %135 = vst [vmem:[#allocation5] sm:$0xff] %v133
    %136 = vst [vmem:[#allocation5 + $0x8] sm:$0xff] %v134
    // Predicated region
    $region14: #{tpu_custom_call.1} parent=1 // pred_check
      _
    $region15: #{tpu_custom_call.1} parent=1 // pred_check_branch
      %138 = sbr.rel (0) target = $region17
    $region16: #{tpu_custom_call.1} parent=1 // pred_region
      %s140 = ssub.s32 256, 256
      %141 = vsyncadd [#allocation4], %s140
      %s142 = sshll.u32 [#allocation5], 4
      %s143 = int_to_ptr.vmem [resolvable:$true] %s142
      %148 = dma.vmem_to_hbm [thread:$0]  %s143, 256, %s2, [#allocation4], 128, 128, 8
    $region17: #{tpu_custom_call.1} parent=1 // pred_fallthru
      _
    // Predicated region
    $region18: #{tpu_custom_call.1} parent=1 // pred_check
      _
    $region19: #{tpu_custom_call.1} parent=1 // pred_check_branch
      %150 = sbr.rel (0) target = $region21
    $region20: #{tpu_custom_call.1} parent=1 // pred_region
      %151 = dma.done [#allocation4], 256
    $region21: #{tpu_custom_call.1} parent=1 // pred_fallthru
      _
    %152 = vsyncpa [#allocation3], 1
    %153 = vsyncpa [#allocation4], 1

</llo_original>
